<compile_context>
chip_gen: v5e
topology: v5e:2x2
jax: 0.10.0
libtpu: 0.0.40
codegen_flags: <defaults>
</compile_context>

<pallas_src>
import functools

import jax
import jax.numpy as jnp
from jax.experimental import pallas as pl
from jax.experimental.pallas import tpu as pltpu


def _round_up(a, b):
    return ((a + b - 1) // b) * b


def _row_entropy_sum(x):
    """(R, C) -> (R, 1): sum_c softmax(x)*log_softmax(x) = sum(ez*z)/s - log(s)."""
    xf = x.astype(jnp.float32)
    m = jnp.max(xf, axis=1, keepdims=True)          # row max       (XLU)
    z = xf - m
    ez = jnp.exp(z)                                 # EUP
    s = jnp.sum(ez, axis=1, keepdims=True)          # softmax denom (XLU)
    ezz = jnp.sum(ez * z, axis=1, keepdims=True)    # sum_c ez*z    (VALU+XLU)
    return ezz / s - jnp.log(s)                     # per-row scalar math only


def _hloss_rows_kernel(x_ref, rows_ref, *, chunk, n_chunks):
    """batch=True: per-row -entropy written as a (tb, 1) block (sign folded in).

    The (tb, C) VMEM block is processed in row chunks so only one chunk's f32
    temporaries are live at a time (bounds VMEM on v7x).
    """
    if n_chunks == 1:
        rows_ref[...] = -_row_entropy_sum(x_ref[...])
        return

    def body(c, carry):
        r0 = pl.multiple_of(c * chunk, chunk)
        rows_ref[pl.ds(r0, chunk), :] = -_row_entropy_sum(x_ref[pl.ds(r0, chunk), :])
        return carry

    jax.lax.fori_loop(0, n_chunks, body, 0)


def _hloss_sum_kernel(x_ref, part_ref, *, b_total, tb, chunk, n_chunks, scale,
                      ragged):
    """batch=False: each grid step writes its own partial sum, scaled by +-1/B.

    Pad-row masking exists only when the grid is ragged, and only runs on the
    last grid step (pl.when), so normal steps carry no masking filler.
    """
    i = pl.program_id(0)

    def chunk_sum(c, masked):
        if n_chunks == 1:
            xs = x_ref[...]
            base = i * tb
        else:
            r0 = pl.multiple_of(c * chunk, chunk)
            xs = x_ref[pl.ds(r0, chunk), :]
            base = i * tb + c * chunk
        rows = _row_entropy_sum(xs)                          # (chunk, 1)
        if masked:
            # Mask AFTER the (possibly non-finite) math: garbage overhang rows
            # select exactly 0.0 and cannot poison the accumulator.
            ridx = jax.lax.broadcasted_iota(jnp.int32, rows.shape, 0) + base
            rows = jnp.where(ridx < b_total, rows, 0.0)
        return jnp.sum(rows)

    def block_sum(masked):
        if n_chunks == 1:
            return chunk_sum(0, masked)
        return jax.lax.fori_loop(
            0, n_chunks,
            lambda c, acc: acc + chunk_sum(c, masked),
            jnp.zeros((), jnp.float32))

    def store(masked):
        part_ref[...] = jnp.broadcast_to(block_sum(masked) * scale,
                                         part_ref.shape)

    if ragged:
        last = pl.num_programs(0) - 1

        @pl.when(i == last)
        def _():
            store(True)

        @pl.when(i != last)
        def _():
            store(False)
    else:
        store(False)


def _tiles(B, C, itemsize):
    """Pick (row tile, compute chunk, n_chunks).

    Row tile: dtype-aware sublane multiple, ~8 MiB of input per block (Pallas
    double-buffers it).  Compute chunk: <=512 rows and <=~2 MiB of f32 temps,
    dividing the tile, so the in-kernel working set stays small (v7x: 64 MiB).
    """
    sub = {4: 8, 2: 16, 1: 32}.get(itemsize, 8)
    budget = 8 * 1024 * 1024
    row_bytes = max(1, C * itemsize)
    max_tb = max(sub, (budget // row_bytes) // sub * sub)
    b_rounded = _round_up(B, sub)
    tb = min(max_tb, b_rounded)
    # Keep >= 2 grid steps when the batch allows it: the grid axis is
    # 'parallel', so v7x's two TensorCores can each stream half the rows.
    if b_rounded // sub >= 2:
        tb = min(tb, max(sub, _round_up(-(-B // 2), sub)))
    rows_by_bytes = max(sub, ((2 * 1024 * 1024) // max(1, C * 4)) // sub * sub)
    chunk = max(sub, (min(tb, 512, rows_by_bytes) // sub) * sub)
    tb = max(chunk, (tb // chunk) * chunk)        # tb is a multiple of chunk
    return tb, chunk, tb // chunk


def hloss(x, neg=True, batch=False):
    """Pallas equivalent of HLoss.forward(x, neg, batch)."""
    B, C = x.shape
    itemsize = jnp.dtype(x.dtype).itemsize
    tb, chunk, n_chunks = _tiles(B, C, itemsize)
    grid_n = pl.cdiv(B, tb)
    ragged = (B % tb) != 0

    # 2x double-buffered input block + a few chunk-sized f32 temporaries.
    block_bytes = tb * C * itemsize
    chunk_f32 = chunk * C * 4
    vmem_limit = int(max(16 << 20,
                         min(48 << 20,
                             2 * block_bytes + 6 * chunk_f32 + (2 << 20))))

    in_spec = pl.BlockSpec((tb, C), lambda i: (i, 0))
    cparams = pltpu.CompilerParams(
        dimension_semantics=("parallel",),
        vmem_limit_bytes=vmem_limit)

    if batch:
        rows = pl.pallas_call(
            functools.partial(_hloss_rows_kernel, chunk=chunk, n_chunks=n_chunks),
            out_shape=jax.ShapeDtypeStruct((B, 1), jnp.float32),
            grid_spec=pltpu.PrefetchScalarGridSpec(
                num_scalar_prefetch=0,
                grid=(grid_n,),
                in_specs=[in_spec],
                out_specs=pl.BlockSpec((tb, 1), lambda i: (i, 0)),
            ),
            compiler_params=cparams,
        )(x)
        return rows[:, 0]                       # sign already folded in-kernel

    scale = (-1.0 if neg else 1.0) / B          # fold sign and 1/B in-kernel
    partials = pl.pallas_call(
        functools.partial(_hloss_sum_kernel, b_total=B, tb=tb, chunk=chunk,
                          n_chunks=n_chunks, scale=scale, ragged=ragged),
        # One (8, 128)-tiled block per grid step: layout-safe, fully parallel,
        # and only grid_n*4 KiB of HBM writeback.
        out_shape=jax.ShapeDtypeStruct((grid_n, 8, 128), jnp.float32),
        grid_spec=pltpu.PrefetchScalarGridSpec(
            num_scalar_prefetch=0,
            grid=(grid_n,),
            in_specs=[in_spec],
            out_specs=pl.BlockSpec((1, 8, 128), lambda i: (i, 0, 0)),
        ),
        compiler_params=cparams,
    )(x)
    return jnp.sum(partials[:, 0, 0])           # tiny (grid_n,) reduction


def _hloss_ref(x, neg=True, batch=False):
    """Pure-JAX reference matching the PyTorch module."""
    xf = x.astype(jnp.float32)
    b = jax.nn.softmax(xf, axis=1) * jax.nn.log_softmax(xf, axis=1)
    if batch:
        return -1.0 * b.sum(axis=1)
    if neg:
        return -1.0 * b.sum() / x.shape[0]
    return b.sum() / x.shape[0]


if __name__ == "__main__":
    key = jax.random.PRNGKey(0)

    # Small shapes consistent with the module: (batch, classes).
    B, C = 16, 128
    x = jax.random.normal(key, (B, C), dtype=jnp.float32) * 3.0

    # default path: neg=True, batch=False -> scalar (parallel partial sums)
    out = jax.block_until_ready(hloss(x))
    ref = _hloss_ref(x)
    assert jnp.allclose(out, ref, atol=1e-4, rtol=1e-4), (out, ref)

    # batch=True path -> per-sample entropy, shape (B,)
    out_b = jax.block_until_ready(hloss(x, batch=True))
    ref_b = _hloss_ref(x, batch=True)
    assert out_b.shape == (B,)
    assert jnp.allclose(out_b, ref_b, atol=1e-4, rtol=1e-4)

    # neg=False path
    out_n = jax.block_until_ready(hloss(x, neg=False))
    ref_n = _hloss_ref(x, neg=False)
    assert jnp.allclose(out_n, ref_n, atol=1e-4, rtol=1e-4)

    # ragged batch (B not divisible by the tile) exercises the ragged grid +
    # last-step masking (no wrapper pad, OOB writes dropped).
    B2 = 13
    x2 = jax.random.normal(jax.random.PRNGKey(1), (B2, C), dtype=jnp.float32) * 2.0
    out2 = jax.block_until_ready(hloss(x2))
    ref2 = _hloss_ref(x2)
    assert jnp.allclose(out2, ref2, atol=1e-4, rtol=1e-4), (out2, ref2)
    out2_b = jax.block_until_ready(hloss(x2, batch=True))
    ref2_b = _hloss_ref(x2, batch=True)
    assert out2_b.shape == (B2,)
    assert jnp.allclose(out2_b, ref2_b, atol=1e-4, rtol=1e-4)

    # moderate batch exercises the multi-chunk fori_loop path AND a ragged
    # last tile (masked accumulation inside the loop).
    B3 = 2050
    x3 = jax.random.normal(jax.random.PRNGKey(2), (B3, C), dtype=jnp.float32) * 2.0
    out3 = jax.block_until_ready(hloss(x3))
    ref3 = _hloss_ref(x3)
    assert jnp.allclose(out3, ref3, atol=1e-4, rtol=1e-4), (out3, ref3)
    out3_b = jax.block_until_ready(hloss(x3, batch=True))
    ref3_b = _hloss_ref(x3, batch=True)
    assert out3_b.shape == (B3,)
    assert jnp.allclose(out3_b, ref3_b, atol=1e-4, rtol=1e-4)

    print("KERNEL_OK")
</pallas_src>

<mosaic_0001>
module attributes {stable_mosaic.version = 11 : i64} {
  func.func @_hloss_sum_kernel(%arg0: i32, %arg1: memref<8x128xf32, #tpu.memory_space<vmem>>, %arg2: memref<1x8x128xf32, #tpu.memory_space<vmem>>) attributes {dimension_semantics = [#tpu.dimension_semantics<parallel>], iteration_bounds = array<i64: 2>, scalar_prefetch = 0 : i64, scratch_operands = 0 : i64, tpu.core_type = #tpu.core_type<tc>, window_params = [{transform_indices = @transform_0, window_bounds = array<i64: 8, 128>}, {transform_indices = @transform_1, window_bounds = array<i64: 1, 8, 128>}]} {
    %c0 = arith.constant 0 : index
    %c0_0 = arith.constant 0 : index
    %0 = vector.load %arg1[%c0, %c0_0] : memref<8x128xf32, #tpu.memory_space<vmem>>, vector<8x128xf32>
    %cst = arith.constant dense<0xFF800000> : vector<8xf32>
    %1 = vector.multi_reduction <maximumf>, %0, %cst [1] : vector<8x128xf32> to vector<8xf32>
    %2 = vector.shape_cast %1 : vector<8xf32> to vector<8x1xf32>
    %3 = vector.broadcast %2 : vector<8x1xf32> to vector<8x128xf32>
    %4 = arith.subf %0, %3 : vector<8x128xf32>
    %5 = math.exp %4 : vector<8x128xf32>
    %cst_1 = arith.constant dense<0.000000e+00> : vector<8xf32>
    %6 = vector.multi_reduction <add>, %5, %cst_1 [1] : vector<8x128xf32> to vector<8xf32>
    %7 = vector.shape_cast %6 : vector<8xf32> to vector<8x1xf32>
    %8 = arith.mulf %5, %4 : vector<8x128xf32>
    %cst_2 = arith.constant dense<0.000000e+00> : vector<8xf32>
    %9 = vector.multi_reduction <add>, %8, %cst_2 [1] : vector<8x128xf32> to vector<8xf32>
    %10 = vector.shape_cast %9 : vector<8xf32> to vector<8x1xf32>
    %11 = arith.divf %10, %7 : vector<8x1xf32>
    %12 = math.log %7 : vector<8x1xf32>
    %13 = arith.subf %11, %12 : vector<8x1xf32>
    %14 = vector.shape_cast %13 : vector<8x1xf32> to vector<1x8x1xf32>
    %cst_3 = arith.constant dense<0.000000e+00> : vector<1xf32>
    %15 = vector.multi_reduction <add>, %14, %cst_3 [1, 2] : vector<1x8x1xf32> to vector<1xf32>
    %16 = vector.shape_cast %15 : vector<1xf32> to vector<1x1x1xf32>
    %17 = vector.extract %16[0, 0, 0] : f32 from vector<1x1x1xf32>
    %cst_4 = arith.constant -6.250000e-02 : f32
    %18 = arith.mulf %17, %cst_4 : f32
    %19 = vector.broadcast %18 : f32 to vector<1x8x128xf32>
    %c0_5 = arith.constant 0 : index
    %c0_6 = arith.constant 0 : index
    %c0_7 = arith.constant 0 : index
    %20 = vector.load %arg2[%c0_5, %c0_6, %c0_7] : memref<1x8x128xf32, #tpu.memory_space<vmem>>, vector<1x8x128xf32>
    tpu.vector_store %arg2[%c0_5, %c0_6, %c0_7], %19 {strides = array<i32>} : memref<1x8x128xf32, #tpu.memory_space<vmem>>, vector<1x8x128xf32>,
    return
  }
  func.func @transform_0(%arg0: i32) -> (i32, i32) {
    %c0_i32 = arith.constant 0 : i32
    %c0_i32_0 = arith.constant 0 : i32
    return %arg0, %c0_i32 : i32, i32
  }
  func.func @transform_1(%arg0: i32) -> (i32, i32, i32) {
    %c0_i32 = arith.constant 0 : i32
    %c0_i32_0 = arith.constant 0 : i32
    %c0_i32_1 = arith.constant 0 : i32
    return %arg0, %c0_i32, %c0_i32_0 : i32, i32, i32
  }
}

</mosaic_0001>

<llo_original>
// kernel: tpu_custom_call.1
$region0: #{tpu_custom_call.1}
  #allocation0 [shape = 'u32[]', space=smem, size = 0x4, offset = 0x4, fixed_abs, tag = 'smem constant byte address 0x4 - core index']
  #allocation1 [shape = 'u32[72,128]{1,0:T(1,128)}', space=vmem, size = 0x9000, scoped, tag = 'internal scratch']
  %s0 = inlined_call_operand.hbm [shape: f32[16,128], index: 0, kind: input, shape index: {}]
  %s1 = inlined_call_operand.hbm [shape: f32[2,8,128], index: 1, kind: output, shape index: {}]
  %s2 = sld [smem:[#allocation0]]
  $region41: #{tpu_custom_call.1} parent=0
    _
  %s4 = ssub.s32 1, %s2
  %s5 = scalar_select 0, %s4, %s2
  $region1: #{tpu_custom_call.1} parent=0
    #allocation2 [shape = 'u8[8192]{0}', space=vmem, size = 0x2000, scoped, tag = 'input window, operand 0']
    #allocation3 [shape = 's32[2]{0}', space=sflag, size = 0x8, scoped, tag = 'scoped memory for tpu_custom_call.1']
    #allocation4 [shape = 's32[2]{0}', space=sflag, size = 0x8, scoped, tag = 'scoped memory for tpu_custom_call.1']
    #allocation5 [shape = 'u8[8192]{0}', space=vmem, size = 0x2000, scoped, tag = 'output window, operand 0']
    %6 = vsyncpa [#allocation3], 0
    %s7 = scalar_lea.sflag [#allocation3], 1
    %8 = vsyncpa %s7, 0
    %9 = vsyncpa [#allocation4], 0
    %s10 = scalar_lea.sflag [#allocation4], 1
    %11 = vsyncpa %s10, 0
    loop: start=0, step=1, limit=4
    $region2: #{tpu_custom_call.1} parent=1 // loop_pre_header
      _
    $region3: #{tpu_custom_call.1} parent=1 // loop_header
      %s13 = sphi 0, %s17
      %p14 = scmp.ge.s32.totalorder %s13, 4
      %s23 = sphi 0, %s25
      %s26 = sphi 0, %s23
      %s27 = sphi 0, %s26
      %s43 = sphi 0, %s27
      %s49 = sphi 0, %s51
      %s52 = sphi 0, %s49
      %s53 = sphi 0, %s52
      %s69 = sphi 0, %s53
    $region4: #{tpu_custom_call.1} parent=1 // loop_header_branch
      %16 = sbr.rel (%p14) target = $region8
    $region5: #{tpu_custom_call.1} parent=1 // loop_body
      %s18 = ssub.s32 %s13, 1
      %s19 = ssub.s32 %s13, 2
      %s20 = sadd.s32 %s13, 1
      %s21 = ssub.s32 %s13, %s20
      %p22 = scmp.eq.s32.totalorder %s21, 0
      %s24 = sadd.s32 %s23, 1
      %s25 = scalar_select %p22, %s23, %s24
      %p28 = pneg %p22
      %p29 = scmp.eq.s32.totalorder %s13, 1
      %p30 = por %p28, %p29
      %p31 = scmp.ne.s32.totalorder %s23, %s26
      %p32 = scmp.eq.s32.totalorder %s13, 0
      %p33 = por %p31, %p32
      %p34 = scmp.ne.s32.totalorder %s23, %s26
      %p35 = scmp.eq.s32.totalorder %s18, 1
      %p36 = por %p34, %p35
      %p37 = scmp.ne.s32.totalorder %s26, %s27
      %p38 = scmp.eq.s32.totalorder %s18, 0
      %p39 = por %p37, %p38
      %p40 = scmp.ne.s32.totalorder %s26, %s27
      %p41 = scmp.eq.s32.totalorder %s19, 1
      %p42 = por %p40, %p41
      %p44 = scmp.ne.s32.totalorder %s27, %s43
      %p45 = scmp.eq.s32.totalorder %s19, 0
      %p46 = por %p44, %p45
      %s47 = ssub.s32 %s13, %s20
      %p48 = scmp.eq.s32.totalorder %s47, 0
      %s50 = sadd.s32 %s49, 1
      %s51 = scalar_select %p48, %s49, %s50
      %p54 = pneg %p48
      %p55 = scmp.eq.s32.totalorder %s13, 1
      %p56 = por %p54, %p55
      %p57 = scmp.ne.s32.totalorder %s49, %s52
      %p58 = scmp.eq.s32.totalorder %s13, 0
      %p59 = por %p57, %p58
      %p60 = scmp.ne.s32.totalorder %s49, %s52
      %p61 = scmp.eq.s32.totalorder %s18, 1
      %p62 = por %p60, %p61
      %p63 = scmp.ne.s32.totalorder %s52, %s53
      %p64 = scmp.eq.s32.totalorder %s18, 0
      %p65 = por %p63, %p64
      %p66 = scmp.ne.s32.totalorder %s52, %s53
      %p67 = scmp.eq.s32.totalorder %s19, 1
      %p68 = por %p66, %p67
      %p70 = scmp.ne.s32.totalorder %s53, %s69
      %p71 = scmp.eq.s32.totalorder %s19, 0
      %p72 = por %p70, %p71
      %p73 = scmp.le.s32.totalorder 1, %s13
      %p74 = scmp.lt.s32.totalorder %s13, 3
      %p75 = pnand %p73, %p74
      %p76 = pneg %p75
      // Predicated region
      $region9: #{tpu_custom_call.1} parent=5 // pred_check
        _
      $region10: #{tpu_custom_call.1} parent=5 // pred_check_branch
        %78 = sbr.rel (%p75) target = $region12
      $region11: #{tpu_custom_call.1} parent=5 // pred_region
        %s79 = ssub.s32 %s13, 1
      $region12: #{tpu_custom_call.1} parent=5 // pred_fallthru
        _
      %p80 = scmp.lt.s32.totalorder %s13, 2
      // Predicated region
      $region13: #{tpu_custom_call.1} parent=5 // pred_check
        %p81 = pneg %p80
      $region14: #{tpu_custom_call.1} parent=5 // pred_check_branch
        %83 = sbr.rel (%p81) target = $region16
      $region15: #{tpu_custom_call.1} parent=5 // pred_region
        // Predicated region
        $region17: #{tpu_custom_call.1} parent=15 // pred_check
          %p84 = pneg %p33
        $region18: #{tpu_custom_call.1} parent=15 // pred_check_branch
          %86 = sbr.rel (%p84) target = $region20
        $region19: #{tpu_custom_call.1} parent=15 // pred_region
          %s87 = sand.u32 %s23, 1
          %s88 = scalar_lea.sflag [#allocation3], %s87
          %s89 = sand.u32 %s23, 1
          %s90 = smul.addr %s89, 8
          %s91 = scalar_lea.vmem [#allocation2], %s90
          %93 = vsyncadd %s88, 0
          %s94 = smul.addr %s13, 8
          %s95 = scalar_lea.hbm %s0, %s94
          %s97 = sshll.u32 %s95, 4
          %s98 = int_to_ptr.hbm [resolvable:$true] %s97
          %s99 = sshll.u32 %s91, 4
          %s100 = int_to_ptr.vmem [resolvable:$true] %s99
          %102 = dma.hbm_to_vmem [thread:$0]  %s98, 128, %s100, %s88
        $region20: #{tpu_custom_call.1} parent=15 // pred_fallthru
          _
      $region16: #{tpu_custom_call.1} parent=5 // pred_fallthru
        _
      %p103 = scmp.le.s32.totalorder 1, %s13
      %p104 = scmp.lt.s32.totalorder %s13, 3
      %p105 = pnand %p103, %p104
      %p106 = pneg %p105
      // Predicated region
      $region21: #{tpu_custom_call.1} parent=5 // pred_check
        _
      $region22: #{tpu_custom_call.1} parent=5 // pred_check_branch
        %108 = sbr.rel (%p105) target = $region24
      $region23: #{tpu_custom_call.1} parent=5 // pred_region
        %s109 = ssub.s32 %s13, 1
        %s110 = sand.u32 %s26, 1
        %s111 = scalar_lea.sflag [#allocation3], %s110
        %s112 = sand.u32 %s26, 1
        %s113 = smul.addr %s112, 8
        %s114 = scalar_lea.vmem [#allocation2], %s113
        // Predicated region
        $region25: #{tpu_custom_call.1} parent=23 // pred_check
          %p115 = pneg %p39
        $region26: #{tpu_custom_call.1} parent=23 // pred_check_branch
          %117 = sbr.rel (%p115) target = $region28
        $region27: #{tpu_custom_call.1} parent=23 // pred_region
          %119 = dma.done %s111, 128
        $region28: #{tpu_custom_call.1} parent=23 // pred_fallthru
          _
        %s120 = sand.u32 %s26, 1
        %s121 = scalar_lea.sflag [#allocation3], %s120
        %s122 = sand.u32 %s26, 1
        %s123 = smul.addr %s122, 8
        %s124 = scalar_lea.vmem [#allocation2], %s123
        %p125 = pneg %p39
        %p126 = pneg %p36
        %p127 = pneg %p65
        %p128 = pneg %p62
        %s129 = sand.u32 %s52, 1
        %s130 = scalar_lea.sflag [#allocation4], %s129
        %s131 = sand.u32 %s52, 1
        %s132 = smul.addr %s131, 8
        %s133 = scalar_lea.vmem [#allocation5], %s132
        %v134 = vld [vmem:[%s114] sm:$0xff]
        %135 = vmax.xlane.f32.xlu0 %v134
        %v136 = vpop.xlane.xlu0 %135
        %v137 = vsub.f32 %v134, %v136
        %v138 = vmul.f32 %v137, 1.442695
        %v139 = vpow.pop %v138
        %140 = vadd.xlane.f32.xlu0 %v139
        %v141 = vpop.xlane.xlu0 %140
        %v142 = vmul.f32 %v139, %v137
        %143 = vadd.xlane.f32.xlu0 %v142
        %v144 = vpop.xlane.xlu0 %143
        %v145 = vrcp.pop %v141
        %v146 = vmul.f32 %v141, %v145
        %v147 = vsub.f32 1.0, %v146
        %v148 = vmul.f32 %v145, %v147
        %v149 = vadd.f32 %v145, %v148
        %vm150 = vweird.f32 %v141
        %vm151 = vweird.f32 %v145
        %vm152 = vmor %vm150, %vm151
        %v153 = vsel %vm152, %v145, %v149
        %v154 = vand.u32 2147483647, %v141
        %vm155 = vcmp.eq.f32.partialorder %v154, 8.507059e+37
        %v156 = vand.u32 %v141, 2147483648
        %v157 = vor.u32 1.1754944e-38, %v156
        %v158 = vsel %vm155, %v157, %v153
        %v159 = vmul.f32 %v144, %v158
        %v160 = vlog2.pop %v141
        %v161 = vmul.f32 %v160, 0.6931472
        %v162 = vsub.f32 %v159, %v161
        %vm163 = vcmask 7168
        %v164 = vsel %vm163, %v162, 0.0
        %165 = vadd.xlane.f32.xlu0 %v164
        %v166 = vpop.xlane.xlu0 %165
        %v167 = vrot.slane %v166, 4
        %v168 = vadd.f32 %v166, %v167
        %v169 = vrot.slane %v168, 2
        %v170 = vadd.f32 %v168, %v169
        %v171 = vrot.slane %v170, 1
        %v172 = vadd.f32 %v170, %v171
        %s173 = vtos %v172
        %s174 = smul.f32 %s173, -0.0625
        %v175 = vstv %s174
        %176 = vst [vmem:[%s133] sm:$0xff] %v175
        %s177 = sand.u32 %s52, 1
        %s178 = scalar_lea.sflag [#allocation4], %s177
        %s179 = sand.u32 %s52, 1
        %s180 = smul.addr %s179, 8
        %s181 = scalar_lea.vmem [#allocation5], %s180
        // Predicated region
        $region29: #{tpu_custom_call.1} parent=23 // pred_check
          %p182 = pneg %p62
        $region30: #{tpu_custom_call.1} parent=23 // pred_check_branch
          %184 = sbr.rel (%p182) target = $region32
        $region31: #{tpu_custom_call.1} parent=23 // pred_region
          %186 = vsyncadd %s178, 0
          %s187 = smul.addr %s18, 8
          %s188 = scalar_lea.hbm %s1, %s187
          %s190 = sshll.u32 %s181, 4
          %s191 = int_to_ptr.vmem [resolvable:$true] %s190
          %s192 = sshll.u32 %s188, 4
          %s193 = int_to_ptr.hbm [resolvable:$true] %s192
          %195 = dma.vmem_to_hbm [thread:$0]  %s191, 128, %s193, %s178
        $region32: #{tpu_custom_call.1} parent=23 // pred_fallthru
          _
      $region24: #{tpu_custom_call.1} parent=5 // pred_fallthru
        _
      %p196 = scmp.le.s32.totalorder 2, %s13
      // Predicated region
      $region33: #{tpu_custom_call.1} parent=5 // pred_check
        %p197 = pneg %p196
      $region34: #{tpu_custom_call.1} parent=5 // pred_check_branch
        %199 = sbr.rel (%p197) target = $region36
      $region35: #{tpu_custom_call.1} parent=5 // pred_region
        %s200 = ssub.s32 %s13, 2
        // Predicated region
        $region37: #{tpu_custom_call.1} parent=35 // pred_check
          %p201 = pneg %p68
        $region38: #{tpu_custom_call.1} parent=35 // pred_check_branch
          %203 = sbr.rel (%p201) target = $region40
        $region39: #{tpu_custom_call.1} parent=35 // pred_region
          %s204 = sand.u32 %s53, 1
          %s205 = scalar_lea.sflag [#allocation4], %s204
          %s206 = sand.u32 %s53, 1
          %s207 = smul.addr %s206, 8
          %s208 = scalar_lea.vmem [#allocation5], %s207
          %210 = dma.done %s205, 128
        $region40: #{tpu_custom_call.1} parent=35 // pred_fallthru
          _
      $region36: #{tpu_custom_call.1} parent=5 // pred_fallthru
        _
    $region6: #{tpu_custom_call.1} parent=1 // loop_footer
      %s17 = sadd.s32 1, %s13
    $region7: #{tpu_custom_call.1} parent=1 // loop_footer_branch
      %12 = sbr.rel target = $region3
    $region8: #{tpu_custom_call.1} parent=1 // loop_exit
      _
    %211 = vsyncpa [#allocation3], 1
    %s212 = scalar_lea.sflag [#allocation3], 1
    %213 = vsyncpa %s212, 1
    %214 = vsyncpa [#allocation4], 1
    %s215 = scalar_lea.sflag [#allocation4], 1
    %216 = vsyncpa %s215, 1

</llo_original>
